<compile_context>
chip_gen: v7x
topology: tpu7x:2x2x1
jax: 0.10.0
libtpu: 0.0.40
codegen_flags: <defaults>
</compile_context>

<pallas_src>
import functools

import jax
import jax.numpy as jnp
from jax.experimental import pallas as pl
from jax.experimental.pallas import tpu as pltpu


# ----------------------------------------------------------------------------
# Kernels
# ----------------------------------------------------------------------------
def _se_fused_kernel(x_ref, w1_ref, w2_ref, o_ref, *, inv_hw):
    # x_ref: (1, C, HW); w1_ref: (C, Cr); w2_ref: (Cr, C); o_ref: (1, C, HW)
    x = x_ref[...].astype(jnp.float32)

    # Squeeze: global average pool (fold 1/HW into a single scalar multiply).
    pooled = jnp.sum(x, axis=-1) * inv_hw                                # (1, C)

    # Excitation: Linear -> ReLU -> Linear -> Sigmoid (bias-free).
    h = jnp.maximum(
        jnp.dot(pooled, w1_ref[...], preferred_element_type=jnp.float32), 0.0)
    y = jax.nn.sigmoid(
        jnp.dot(h, w2_ref[...], preferred_element_type=jnp.float32))     # (1, C)

    # Scale: broadcast the per-(batch, channel) gate over all spatial lanes.
    o_ref[...] = (x * y[:, :, None]).astype(o_ref.dtype)


def _se_gate_kernel(x_ref, w1_ref, w2_ref, gate_ref, acc_ref, *, inv_hw):
    # Pass 1 of the two-pass path: accumulate the spatial sum over HW tiles
    # (reduction axis t is innermost / "arbitrary"), then run the tiny
    # excitation on the last tile and emit the (1, C, 1) gate.
    t = pl.program_id(1)

    @pl.when(t == 0)
    def _():
        acc_ref[...] = jnp.zeros_like(acc_ref)

    acc_ref[...] += jnp.sum(x_ref[...].astype(jnp.float32), axis=-1)     # (1, C)

    @pl.when(t == pl.num_programs(1) - 1)
    def _():
        pooled = acc_ref[...] * inv_hw
        h = jnp.maximum(
            jnp.dot(pooled, w1_ref[...], preferred_element_type=jnp.float32), 0.0)
        y = jax.nn.sigmoid(
            jnp.dot(h, w2_ref[...], preferred_element_type=jnp.float32))  # (1, C)
        gate_ref[...] = y[:, :, None].astype(gate_ref.dtype)              # (1, C, 1)


def _se_scale_kernel(gate_ref, x_ref, o_ref):
    # Pass 2: pure streaming multiply; gate is a tiny resident (1, C, 1) block,
    # x/o tiles are lane-dense (HWt is a multiple of 128).
    o_ref[...] = (x_ref[...].astype(jnp.float32) * gate_ref[...]).astype(o_ref.dtype)


# ----------------------------------------------------------------------------
# Wrapper
# ----------------------------------------------------------------------------
def _choose_hw_tile(C, HW, max_tile_bytes, dtype_bytes):
    """Largest divisor of HW that is a multiple of 128 and fits the tile budget."""
    if HW % 128 != 0:
        # Block last dim must be a multiple of 128 or the full extent; fall back
        # to the full extent (typical ResNet SE spatial sizes stay small here).
        return HW
    max_lanes = max(128, max_tile_bytes // (C * dtype_bytes))
    best = 128
    t = 128
    while t <= min(HW, max_lanes):
        if HW % t == 0:
            best = t
        t += 128
    return best


def se_layer(x, w1_t, w2_t, *,
             max_tile_bytes=4 * 1024 * 1024,
             vmem_limit_bytes=48 * 1024 * 1024):
    """SE forward. x: (B, C, H, W); w1_t: (C, C//r); w2_t: (C//r, C)."""
    B, C, H, W = x.shape
    HW = H * W
    Cr = w1_t.shape[1]
    xr = x.reshape(B, C, HW)
    dtype_bytes = x.dtype.itemsize
    inv_hw = 1.0 / HW

    cparams_1d = pltpu.CompilerParams(
        dimension_semantics=("parallel",),
        vmem_limit_bytes=vmem_limit_bytes,
    )

    # ---- Fused path: one (1, C, HW) block per batch fits the tile budget ----
    if C * HW * dtype_bytes <= max_tile_bytes:
        out = pl.pallas_call(
            functools.partial(_se_fused_kernel, inv_hw=inv_hw),
            out_shape=jax.ShapeDtypeStruct((B, C, HW), x.dtype),
            grid_spec=pltpu.PrefetchScalarGridSpec(
                num_scalar_prefetch=0,
                grid=(B,),
                in_specs=[
                    pl.BlockSpec((1, C, HW), lambda b: (b, 0, 0)),
                    pl.BlockSpec((C, Cr), lambda b: (0, 0)),
                    pl.BlockSpec((Cr, C), lambda b: (0, 0)),
                ],
                out_specs=pl.BlockSpec((1, C, HW), lambda b: (b, 0, 0)),
            ),
            compiler_params=cparams_1d,
        )(xr, w1_t, w2_t)
        return out.reshape(B, C, H, W)

    # ---- Two-pass path: tiled HW reduction then streaming scale ----
    HWt = _choose_hw_tile(C, HW, max_tile_bytes, dtype_bytes)
    T = HW // HWt

    gate = pl.pallas_call(
        functools.partial(_se_gate_kernel, inv_hw=inv_hw),
        out_shape=jax.ShapeDtypeStruct((B, C, 1), jnp.float32),
        grid_spec=pltpu.PrefetchScalarGridSpec(
            num_scalar_prefetch=0,
            grid=(B, T),
            in_specs=[
                pl.BlockSpec((1, C, HWt), lambda b, t: (b, 0, t)),
                pl.BlockSpec((C, Cr), lambda b, t: (0, 0)),
                pl.BlockSpec((Cr, C), lambda b, t: (0, 0)),
            ],
            out_specs=pl.BlockSpec((1, C, 1), lambda b, t: (b, 0, 0)),
            scratch_shapes=[pltpu.VMEM((1, C), jnp.float32)],
        ),
        compiler_params=pltpu.CompilerParams(
            dimension_semantics=("parallel", "arbitrary"),
            vmem_limit_bytes=vmem_limit_bytes,
        ),
    )(xr, w1_t, w2_t)

    out = pl.pallas_call(
        _se_scale_kernel,
        out_shape=jax.ShapeDtypeStruct((B, C, HW), x.dtype),
        grid_spec=pltpu.PrefetchScalarGridSpec(
            num_scalar_prefetch=0,
            grid=(B, T),
            in_specs=[
                pl.BlockSpec((1, C, 1), lambda b, t: (b, 0, 0)),
                pl.BlockSpec((1, C, HWt), lambda b, t: (b, 0, t)),
            ],
            out_specs=pl.BlockSpec((1, C, HWt), lambda b, t: (b, 0, t)),
        ),
        compiler_params=pltpu.CompilerParams(
            dimension_semantics=("parallel", "parallel"),
            vmem_limit_bytes=vmem_limit_bytes,
        ),
    )(gate, xr)
    return out.reshape(B, C, H, W)


# ----------------------------------------------------------------------------
# Reference + test
# ----------------------------------------------------------------------------
def _reference(x, w1_t, w2_t):
    pooled = jnp.mean(x, axis=(2, 3))
    h = jnp.maximum(pooled @ w1_t, 0.0)
    y = jax.nn.sigmoid(h @ w2_t)
    return x * y[:, :, None, None]


if __name__ == "__main__":
    # SELayer(channel=32, reduction=16) on a 16x16 spatial map (HW=256, a
    # multiple of 128 -> lane-dense tiles).
    B, C, H, W = 2, 32, 16, 16
    reduction = 16
    Cr = C // reduction

    key = jax.random.PRNGKey(0)
    kx, k1, k2 = jax.random.split(key, 3)

    x = jax.random.normal(kx, (B, C, H, W), dtype=jnp.float32)

    # torch nn.Linear(C, Cr, bias=False).weight has shape (Cr, C); the layer
    # computes pooled @ weight.T, so pass the transposed weights.
    fc1_w = jax.random.normal(k1, (Cr, C), dtype=jnp.float32) * 0.1
    fc2_w = jax.random.normal(k2, (C, Cr), dtype=jnp.float32) * 0.1
    w1_t = fc1_w.T  # (C, Cr)
    w2_t = fc2_w.T  # (Cr, C)

    ref = _reference(x, w1_t, w2_t)

    # Fused per-batch path.
    out_fused = jax.block_until_ready(se_layer(x, w1_t, w2_t))
    assert out_fused.shape == (B, C, H, W)
    assert jnp.allclose(out_fused, ref, atol=1e-5, rtol=1e-5)

    # Force the tiled two-pass path (HW split into 128-lane tiles).
    out_tiled = jax.block_until_ready(
        se_layer(x, w1_t, w2_t, max_tile_bytes=16 * 1024))
    assert jnp.allclose(out_tiled, ref, atol=1e-5, rtol=1e-5)

    print("KERNEL_OK")
</pallas_src>

<mosaic_0001>
module attributes {stable_mosaic.version = 11 : i64} {
  func.func @_se_fused_kernel(%arg0: i32, %arg1: memref<1x32x256xf32, #tpu.memory_space<vmem>>, %arg2: memref<32x2xf32, #tpu.memory_space<vmem>>, %arg3: memref<2x32xf32, #tpu.memory_space<vmem>>, %arg4: memref<1x32x256xf32, #tpu.memory_space<vmem>>) attributes {dimension_semantics = [#tpu.dimension_semantics<parallel>], iteration_bounds = array<i64: 2>, scalar_prefetch = 0 : i64, scratch_operands = 0 : i64, tpu.core_type = #tpu.core_type<tc>, window_params = [{transform_indices = @transform_0, window_bounds = array<i64: 1, 32, 256>}, {pipeline_mode = #tpu.pipeline_mode<synchronous>, transform_indices = @transform_1, window_bounds = array<i64: 32, 2>}, {pipeline_mode = #tpu.pipeline_mode<synchronous>, transform_indices = @transform_2, window_bounds = array<i64: 2, 32>}, {transform_indices = @transform_3, window_bounds = array<i64: 1, 32, 256>}]} {
    %c0 = arith.constant 0 : index
    %c0_0 = arith.constant 0 : index
    %c0_1 = arith.constant 0 : index
    %0 = vector.load %arg1[%c0, %c0_0, %c0_1] : memref<1x32x256xf32, #tpu.memory_space<vmem>>, vector<1x32x256xf32>
    %cst = arith.constant dense<0.000000e+00> : vector<1x32xf32>
    %1 = vector.multi_reduction <add>, %0, %cst [2] : vector<1x32x256xf32> to vector<1x32xf32>
    %cst_2 = arith.constant 3.906250e-03 : f32
    %2 = vector.broadcast %cst_2 : f32 to vector<1x32xf32>
    %3 = arith.mulf %1, %2 : vector<1x32xf32>
    %c0_3 = arith.constant 0 : index
    %c0_4 = arith.constant 0 : index
    %4 = vector.load %arg2[%c0_3, %c0_4] : memref<32x2xf32, #tpu.memory_space<vmem>>, vector<32x2xf32>
    %cst_5 = arith.constant dense<0.000000e+00> : vector<1x2xf32>
    %5 = tpu.matmul %3, %4, %cst_5 {dimension_numbers = #tpu.dot_dimension_numbers<[1], [0], [0], [1], [0, 0, 1, 1], [], []>} : vector<1x32xf32>, vector<32x2xf32>, vector<1x2xf32> -> vector<1x2xf32>
    %cst_6 = arith.constant 0.000000e+00 : f32
    %6 = vector.broadcast %cst_6 : f32 to vector<1x2xf32>
    %7 = arith.maximumf %5, %6 : vector<1x2xf32>
    %c0_7 = arith.constant 0 : index
    %c0_8 = arith.constant 0 : index
    %8 = vector.load %arg3[%c0_7, %c0_8] : memref<2x32xf32, #tpu.memory_space<vmem>>, vector<2x32xf32>
    %cst_9 = arith.constant dense<0.000000e+00> : vector<1x32xf32>
    %9 = tpu.matmul %7, %8, %cst_9 {dimension_numbers = #tpu.dot_dimension_numbers<[1], [0], [0], [1], [0, 0, 1, 1], [], []>} : vector<1x2xf32>, vector<2x32xf32>, vector<1x32xf32> -> vector<1x32xf32>
    %10 = arith.negf %9 : vector<1x32xf32>
    %11 = math.exp %10 : vector<1x32xf32>
    %cst_10 = arith.constant 1.000000e+00 : f32
    %12 = vector.broadcast %cst_10 : f32 to vector<1x32xf32>
    %13 = arith.addf %12, %11 : vector<1x32xf32>
    %14 = arith.divf %12, %13 : vector<1x32xf32>
    %15 = vector.shape_cast %14 : vector<1x32xf32> to vector<1x32x1xf32>
    %16 = vector.broadcast %15 : vector<1x32x1xf32> to vector<1x32x256xf32>
    %17 = arith.mulf %0, %16 : vector<1x32x256xf32>
    %c0_11 = arith.constant 0 : index
    %c0_12 = arith.constant 0 : index
    %c0_13 = arith.constant 0 : index
    %18 = vector.load %arg4[%c0_11, %c0_12, %c0_13] : memref<1x32x256xf32, #tpu.memory_space<vmem>>, vector<1x32x256xf32>
    tpu.vector_store %arg4[%c0_11, %c0_12, %c0_13], %17 {strides = array<i32>} : memref<1x32x256xf32, #tpu.memory_space<vmem>>, vector<1x32x256xf32>,
    return
  }
  func.func @transform_0(%arg0: i32) -> (i32, i32, i32) {
    %c0_i32 = arith.constant 0 : i32
    %c0_i32_0 = arith.constant 0 : i32
    %c0_i32_1 = arith.constant 0 : i32
    return %arg0, %c0_i32, %c0_i32_0 : i32, i32, i32
  }
  func.func @transform_1(%arg0: i32) -> (i32, i32) {
    %c0_i32 = arith.constant 0 : i32
    %c0_i32_0 = arith.constant 0 : i32
    %c0_i32_1 = arith.constant 0 : i32
    return %c0_i32, %c0_i32_0 : i32, i32
  }
  func.func @transform_2(%arg0: i32) -> (i32, i32) {
    %c0_i32 = arith.constant 0 : i32
    %c0_i32_0 = arith.constant 0 : i32
    %c0_i32_1 = arith.constant 0 : i32
    return %c0_i32, %c0_i32_0 : i32, i32
  }
  func.func @transform_3(%arg0: i32) -> (i32, i32, i32) {
    %c0_i32 = arith.constant 0 : i32
    %c0_i32_0 = arith.constant 0 : i32
    %c0_i32_1 = arith.constant 0 : i32
    return %arg0, %c0_i32, %c0_i32_0 : i32, i32, i32
  }
}

</mosaic_0001>

<llo_original>
// kernel: tpu_custom_call.1
$region0: #{tpu_custom_call.1}
  #allocation0 [shape = 'u32[]', space=smem, size = 0x4, offset = 0x4, fixed_abs, tag = 'smem constant byte address 0x4 - core index']
  #allocation1 [shape = 'u32[144,128]{1,0:T(1,128)}', space=vmem, size = 0x12000, scoped, tag = 'internal scratch']
  %s0 = inlined_call_operand.hbm [shape: f32[2,32,256], index: 0, kind: input, shape index: {}]
  %s1 = inlined_call_operand.vmem [shape: f32[32,2], index: 1, kind: input, shape index: {}]
  %s2 = inlined_call_operand.vmem [shape: f32[2,32], index: 2, kind: input, shape index: {}]
  %s3 = inlined_call_operand.hbm [shape: f32[2,32,256], index: 3, kind: output, shape index: {}]
  %s4 = sld [smem:[#allocation0]]
  $region49: #{tpu_custom_call.1} parent=0
    _
  %s6 = ssub.s32 1, %s4
  %s7 = scalar_select 0, %s6, %s4
  $region1: #{tpu_custom_call.1} parent=0
    #allocation2 [shape = 'u8[65536]{0}', space=vmem, size = 0x10000, scoped, tag = 'input window, operand 0']
    #allocation3 [shape = 's32[2]{0}', space=sflag, size = 0x8, scoped, tag = 'scoped memory for tpu_custom_call.1']
    #allocation4 [shape = 's32[2]{0}', space=sflag, size = 0x8, scoped, tag = 'scoped memory for tpu_custom_call.1']
    #allocation5 [shape = 'u8[65536]{0}', space=vmem, size = 0x10000, scoped, tag = 'output window, operand 0']
    %8 = vsyncpa [#allocation3], 0
    %s9 = scalar_lea.sflag [#allocation3], 1
    %10 = vsyncpa %s9, 0
    %11 = vsyncpa [#allocation4], 0
    %s12 = scalar_lea.sflag [#allocation4], 1
    %13 = vsyncpa %s12, 0
    loop: start=0, step=1, limit=4
    $region2: #{tpu_custom_call.1} parent=1 // loop_pre_header
      _
    $region3: #{tpu_custom_call.1} parent=1 // loop_header
      %s15 = sphi 0, %s19
      %p16 = scmp.ge.s32.totalorder %s15, 4
      %s25 = sphi 0, %s27
      %s28 = sphi 0, %s25
      %s29 = sphi 0, %s28
      %s45 = sphi 0, %s29
      %s49 = sphi 0, %s49
      %s51 = sphi 0, %s49
      %s52 = sphi 0, %s51
      %s66 = sphi 0, %s52
      %s70 = sphi 0, %s70
      %s72 = sphi 0, %s70
      %s73 = sphi 0, %s72
      %s87 = sphi 0, %s73
      %s93 = sphi 0, %s95
      %s96 = sphi 0, %s93
      %s97 = sphi 0, %s96
      %s113 = sphi 0, %s97
    $region4: #{tpu_custom_call.1} parent=1 // loop_header_branch
      %18 = sbr.rel (%p16) target = $region8
    $region5: #{tpu_custom_call.1} parent=1 // loop_body
      %s20 = ssub.s32 %s15, 1
      %s21 = ssub.s32 %s15, 2
      %s22 = sadd.s32 %s15, 1
      %s23 = ssub.s32 %s15, %s22
      %p24 = scmp.eq.s32.totalorder %s23, 0
      %s26 = sadd.s32 %s25, 1
      %s27 = scalar_select %p24, %s25, %s26
      %p30 = pneg %p24
      %p31 = scmp.eq.s32.totalorder %s15, 1
      %p32 = por %p30, %p31
      %p33 = scmp.ne.s32.totalorder %s25, %s28
      %p34 = scmp.eq.s32.totalorder %s15, 0
      %p35 = por %p33, %p34
      %p36 = scmp.ne.s32.totalorder %s25, %s28
      %p37 = scmp.eq.s32.totalorder %s20, 1
      %p38 = por %p36, %p37
      %p39 = scmp.ne.s32.totalorder %s28, %s29
      %p40 = scmp.eq.s32.totalorder %s20, 0
      %p41 = por %p39, %p40
      %p42 = scmp.ne.s32.totalorder %s28, %s29
      %p43 = scmp.eq.s32.totalorder %s21, 1
      %p44 = por %p42, %p43
      %p46 = scmp.ne.s32.totalorder %s29, %s45
      %p47 = scmp.eq.s32.totalorder %s21, 0
      %p48 = por %p46, %p47
      %s50 = sadd.s32 %s49, 1
      %p53 = scmp.eq.s32.totalorder %s15, 1
      %p54 = scmp.ne.s32.totalorder %s49, %s51
      %p55 = scmp.eq.s32.totalorder %s15, 0
      %p56 = por %p54, %p55
      %p57 = scmp.ne.s32.totalorder %s49, %s51
      %p58 = scmp.eq.s32.totalorder %s20, 1
      %p59 = por %p57, %p58
      %p60 = scmp.ne.s32.totalorder %s51, %s52
      %p61 = scmp.eq.s32.totalorder %s20, 0
      %p62 = por %p60, %p61
      %p63 = scmp.ne.s32.totalorder %s51, %s52
      %p64 = scmp.eq.s32.totalorder %s21, 1
      %p65 = por %p63, %p64
      %p67 = scmp.ne.s32.totalorder %s52, %s66
      %p68 = scmp.eq.s32.totalorder %s21, 0
      %p69 = por %p67, %p68
      %s71 = sadd.s32 %s70, 1
      %p74 = scmp.eq.s32.totalorder %s15, 1
      %p75 = scmp.ne.s32.totalorder %s70, %s72
      %p76 = scmp.eq.s32.totalorder %s15, 0
      %p77 = por %p75, %p76
      %p78 = scmp.ne.s32.totalorder %s70, %s72
      %p79 = scmp.eq.s32.totalorder %s20, 1
      %p80 = por %p78, %p79
      %p81 = scmp.ne.s32.totalorder %s72, %s73
      %p82 = scmp.eq.s32.totalorder %s20, 0
      %p83 = por %p81, %p82
      %p84 = scmp.ne.s32.totalorder %s72, %s73
      %p85 = scmp.eq.s32.totalorder %s21, 1
      %p86 = por %p84, %p85
      %p88 = scmp.ne.s32.totalorder %s73, %s87
      %p89 = scmp.eq.s32.totalorder %s21, 0
      %p90 = por %p88, %p89
      %s91 = ssub.s32 %s15, %s22
      %p92 = scmp.eq.s32.totalorder %s91, 0
      %s94 = sadd.s32 %s93, 1
      %s95 = scalar_select %p92, %s93, %s94
      %p98 = pneg %p92
      %p99 = scmp.eq.s32.totalorder %s15, 1
      %p100 = por %p98, %p99
      %p101 = scmp.ne.s32.totalorder %s93, %s96
      %p102 = scmp.eq.s32.totalorder %s15, 0
      %p103 = por %p101, %p102
      %p104 = scmp.ne.s32.totalorder %s93, %s96
      %p105 = scmp.eq.s32.totalorder %s20, 1
      %p106 = por %p104, %p105
      %p107 = scmp.ne.s32.totalorder %s96, %s97
      %p108 = scmp.eq.s32.totalorder %s20, 0
      %p109 = por %p107, %p108
      %p110 = scmp.ne.s32.totalorder %s96, %s97
      %p111 = scmp.eq.s32.totalorder %s21, 1
      %p112 = por %p110, %p111
      %p114 = scmp.ne.s32.totalorder %s97, %s113
      %p115 = scmp.eq.s32.totalorder %s21, 0
      %p116 = por %p114, %p115
      %p117 = scmp.le.s32.totalorder 1, %s15
      %p118 = scmp.lt.s32.totalorder %s15, 3
      %p119 = pnand %p117, %p118
      %p120 = pneg %p119
      // Predicated region
      $region9: #{tpu_custom_call.1} parent=5 // pred_check
        _
      $region10: #{tpu_custom_call.1} parent=5 // pred_check_branch
        %122 = sbr.rel (%p119) target = $region12
      $region11: #{tpu_custom_call.1} parent=5 // pred_region
        %s123 = ssub.s32 %s15, 1
        // Predicated region
        $region13: #{tpu_custom_call.1} parent=11 // pred_check
          %p124 = pneg %p62
        $region14: #{tpu_custom_call.1} parent=11 // pred_check_branch
          %126 = sbr.rel (%p124) target = $region16
        $region15: #{tpu_custom_call.1} parent=11 // pred_region
          _
        $region16: #{tpu_custom_call.1} parent=11 // pred_fallthru
          _
        // Predicated region
        $region17: #{tpu_custom_call.1} parent=11 // pred_check
          %p127 = pneg %p83
        $region18: #{tpu_custom_call.1} parent=11 // pred_check_branch
          %129 = sbr.rel (%p127) target = $region20
        $region19: #{tpu_custom_call.1} parent=11 // pred_region
          _
        $region20: #{tpu_custom_call.1} parent=11 // pred_fallthru
          _
      $region12: #{tpu_custom_call.1} parent=5 // pred_fallthru
        _
      %p130 = scmp.lt.s32.totalorder %s15, 2
      // Predicated region
      $region21: #{tpu_custom_call.1} parent=5 // pred_check
        %p131 = pneg %p130
      $region22: #{tpu_custom_call.1} parent=5 // pred_check_branch
        %133 = sbr.rel (%p131) target = $region24
      $region23: #{tpu_custom_call.1} parent=5 // pred_region
        // Predicated region
        $region25: #{tpu_custom_call.1} parent=23 // pred_check
          %p134 = pneg %p35
        $region26: #{tpu_custom_call.1} parent=23 // pred_check_branch
          %136 = sbr.rel (%p134) target = $region28
        $region27: #{tpu_custom_call.1} parent=23 // pred_region
          %s137 = sand.u32 %s25, 1
          %s138 = scalar_lea.sflag [#allocation3], %s137
          %s139 = sand.u32 %s25, 1
          %s140 = smul.addr %s139, 64
          %s141 = scalar_lea.vmem [#allocation2], %s140
          %s143 = ssub.s32 1024, 1024
          %144 = vsyncadd %s138, %s143
          %s145 = smul.addr %s15, 8
          %s146 = smul.addr %s145, 128
          %s147 = scalar_lea.hbm %s0, %s146
          %s148 = sshll.u32 %s141, 4
          %s149 = int_to_ptr.vmem [resolvable:$true] %s148
          %154 = dma.hbm_to_vmem [thread:$0]  %s147, 1024, %s149, %s138, 256, 256, 16
        $region28: #{tpu_custom_call.1} parent=23 // pred_fallthru
          _
      $region24: #{tpu_custom_call.1} parent=5 // pred_fallthru
        _
      %p155 = scmp.le.s32.totalorder 1, %s15
      %p156 = scmp.lt.s32.totalorder %s15, 3
      %p157 = pnand %p155, %p156
      %p158 = pneg %p157
      // Predicated region
      $region29: #{tpu_custom_call.1} parent=5 // pred_check
        _
      $region30: #{tpu_custom_call.1} parent=5 // pred_check_branch
        %160 = sbr.rel (%p157) target = $region32
      $region31: #{tpu_custom_call.1} parent=5 // pred_region
        %s161 = ssub.s32 %s15, 1
        %s162 = sand.u32 %s28, 1
        %s163 = scalar_lea.sflag [#allocation3], %s162
        %s164 = sand.u32 %s28, 1
        %s165 = smul.addr %s164, 64
        %s166 = scalar_lea.vmem [#allocation2], %s165
        // Predicated region
        $region33: #{tpu_custom_call.1} parent=31 // pred_check
          %p167 = pneg %p41
        $region34: #{tpu_custom_call.1} parent=31 // pred_check_branch
          %169 = sbr.rel (%p167) target = $region36
        $region35: #{tpu_custom_call.1} parent=31 // pred_region
          %170 = dma.done %s163, 1024
        $region36: #{tpu_custom_call.1} parent=31 // pred_fallthru
          _
        %s171 = sand.u32 %s28, 1
        %s172 = scalar_lea.sflag [#allocation3], %s171
        %s173 = sand.u32 %s28, 1
        %s174 = smul.addr %s173, 64
        %s175 = scalar_lea.vmem [#allocation2], %s174
        %p176 = pneg %p41
        %p177 = pneg %p38
        %p178 = pneg %p62
        %p179 = pneg %p59
        %p180 = pneg %p83
        %p181 = pneg %p80
        %p182 = pneg %p109
        %p183 = pneg %p106
        %s184 = sand.u32 %s96, 1
        %s185 = scalar_lea.sflag [#allocation4], %s184
        %s186 = sand.u32 %s96, 1
        %s187 = smul.addr %s186, 64
        %s188 = scalar_lea.vmem [#allocation5], %s187
        %v189 = vld [vmem:[%s166] sm:$0xff]
        %v190 = vld [vmem:[%s166 + $0x8] sm:$0xff]
        %v191 = vld [vmem:[%s166 + $0x10] sm:$0xff]
        %v192 = vld [vmem:[%s166 + $0x18] sm:$0xff]
        %v193 = vld [vmem:[%s166 + $0x20] sm:$0xff]
        %v194 = vld [vmem:[%s166 + $0x28] sm:$0xff]
        %v195 = vld [vmem:[%s166 + $0x30] sm:$0xff]
        %v196 = vld [vmem:[%s166 + $0x38] sm:$0xff]
        %v197 = vadd.f32 %v189, %v190
        %198 = vadd.xlane.f32.xlu0 %v197
        %v199 = vpop.xlane.xlu0 %198
        %v200 = vadd.f32 %v191, %v192
        %201 = vadd.xlane.f32.xlu0 %v200
        %v202 = vpop.xlane.xlu0 %201
        %v203 = vadd.f32 %v193, %v194
        %204 = vadd.xlane.f32.xlu0 %v203
        %v205 = vpop.xlane.xlu0 %204
        %v206 = vadd.f32 %v195, %v196
        %207 = vadd.xlane.f32.xlu0 %v206
        %v208 = vpop.xlane.xlu0 %207
        %v209 = vmul.f32 %v199, 0.00390625
        %v210 = vmul.f32 %v202, 0.00390625
        %v211 = vmul.f32 %v205, 0.00390625
        %v212 = vmul.f32 %v208, 0.00390625
        %v213 = vld [vmem:[%s1] sm:$0xff]
        %v214 = vld [vmem:[%s1 + $0x8] sm:$0xff]
        %v215 = vld [vmem:[%s1 + $0x10] sm:$0xff]
        %v216 = vld [vmem:[%s1 + $0x18] sm:$0xff]
        %v221 = vlaneseq
        %v222 = vand.u32 %v221, 127
        %v223 = vlaneseq
        %v224 = vshrl.u32 %v223, 7
        %v225 = vsub.s32 %v222, %v224
        %v226 = vrot.slane %v209, %v225
        %v227 = vadd.s32 %v222, 4294967288
        %v228 = vlaneseq
        %v229 = vshrl.u32 %v228, 7
        %v230 = vsub.s32 %v227, %v229
        %v231 = vrot.slane %v210, %v230
        %vm232 = vcmask 130112
        %v233 = vsel %vm232, %v231, %v226
        %v234 = vadd.s32 %v222, 4294967280
        %v235 = vlaneseq
        %v236 = vshrl.u32 %v235, 7
        %v237 = vsub.s32 %v234, %v236
        %v238 = vrot.slane %v211, %v237
        %vm239 = vcmask 195712
        %v240 = vsel %vm239, %v238, %v233
        %v241 = vadd.s32 %v222, 4294967272
        %v242 = vlaneseq
        %v243 = vshrl.u32 %v242, 7
        %v244 = vsub.s32 %v241, %v243
        %v245 = vrot.slane %v212, %v244
        %vm246 = vcmask 261312
        %v247 = vsel %vm246, %v245, %v240
        %vm248 = vcmask 261120
        %v249 = vsel %vm248, %v247, 0
        %251 = vmatprep.subr.mxu0 0.0
        %252 = vmatpush1.msra.mxu0 %v213
        %253 = vmatprep.subr.mxu0 0.0
        %254 = vmatpush1.msra.mxu0 %v214
        %255 = vmatprep.subr.mxu0 0.0
        %256 = vmatpush1.msra.mxu0 %v215
        %257 = vmatprep.subr.mxu0 0.0
        %258 = vmatpush1.msra.mxu0 %v216
        %259 = vmatprep.subr.mxu0 0.0
        %260 = vmatpush1.msra.mxu0 0.0
        %261 = vmatprep.subr.mxu0 0.0
        %262 = vmatpush1.msra.mxu0 0.0
        %263 = vmatprep.subr.mxu0 0.0
        %264 = vmatpush1.msra.mxu0 0.0
        %265 = vmatprep.subr.mxu0 0.0
        %266 = vmatpush1.msra.mxu0 0.0
        %267 = vmatprep.subr.mxu0 0.0
        %268 = vmatpush1.msra.mxu0 0.0
        %269 = vmatprep.subr.mxu0 0.0
        %270 = vmatpush1.msra.mxu0 0.0
        %271 = vmatprep.subr.mxu0 0.0
        %272 = vmatpush1.msra.mxu0 0.0
        %273 = vmatprep.subr.mxu0 0.0
        %274 = vmatpush1.msra.mxu0 0.0
        %275 = vmatprep.subr.mxu0 0.0
        %276 = vmatpush1.msra.mxu0 0.0
        %277 = vmatprep.subr.mxu0 0.0
        %278 = vmatpush1.msra.mxu0 0.0
        %279 = vmatprep.subr.mxu0 0.0
        %280 = vmatpush1.msra.mxu0 0.0
        %281 = vmatprep.subr.mxu0 0.0
        %282 = vmatpush1.msra.mxu0 0.0
        %283 = vmatprep.subr.mxu0 0.0
        %284 = vmatpush1.msra.mxu0 0.0
        %285 = vmatprep.subr.mxu0 0.0
        %286 = vmatpush1.msra.mxu0 0.0
        %287 = vmatprep.subr.mxu0 0.0
        %288 = vmatpush1.msra.mxu0 0.0
        %289 = vmatprep.subr.mxu0 0.0
        %290 = vmatpush1.msra.mxu0 0.0
        %291 = vmatprep.subr.mxu0 0.0
        %292 = vmatpush1.msra.mxu0 0.0
        %293 = vmatprep.subr.mxu0 0.0
        %294 = vmatpush1.msra.mxu0 0.0
        %295 = vmatprep.subr.mxu0 0.0
        %296 = vmatpush1.msra.mxu0 0.0
        %297 = vmatprep.subr.mxu0 0.0
        %298 = vmatpush1.msra.mxu0 0.0
        %299 = vmatprep.subr.mxu0 0.0
        %300 = vmatpush1.msra.mxu0 0.0
        %301 = vmatprep.subr.mxu0 0.0
        %302 = vmatpush1.msra.mxu0 0.0
        %303 = vmatprep.subr.mxu0 0.0
        %304 = vmatpush1.msra.mxu0 0.0
        %305 = vmatprep.subr.mxu0 0.0
        %306 = vmatpush1.msra.mxu0 0.0
        %307 = vmatprep.subr.mxu0 0.0
        %308 = vmatpush1.msra.mxu0 0.0
        %309 = vmatprep.subr.mxu0 0.0
        %310 = vmatpush1.msra.mxu0 0.0
        %311 = vmatprep.subr.mxu0 0.0
        %312 = vmatpush1.msra.mxu0 0.0
        %313 = vmatprep.subr.mxu0 0.0
        %314 = vmatpush1.msra.mxu0 0.0
        %315 = vmatprep.mubr.f32.mxu0 0.0
        %316 = vmatmul.mubr.f32.gmra.mrb[0].mxu0 %v249
        %v317 = vpop.f32.mrb[0].mxu0
        %v318 = vadd.f32 0.0, %v317
        %v319 = vpop.f32.mrb[0].mxu0
        %320 = vdwg.mxu0
        %v321 = vmax.f32 %v318, 0.0
        %v322 = vld [vmem:[%s2] sm:$0x3]
        %vm323 = vcmask 15360
        %v325 = vsel %vm323, %v321, 0
        %vm327 = vcmask 1041408
        %v329 = vsel %vm327, %v322, 0
        %331 = vmatprep.subr.mxu0 0.0
        %332 = vmatpush1.msra.mxu0 %v329
        %333 = vmatprep.subr.mxu0 0.0
        %334 = vmatpush1.msra.mxu0 0.0
        %335 = vmatprep.subr.mxu0 0.0
        %336 = vmatpush1.msra.mxu0 0.0
        %337 = vmatprep.subr.mxu0 0.0
        %338 = vmatpush1.msra.mxu0 0.0
        %339 = vmatprep.subr.mxu0 0.0
        %340 = vmatpush1.msra.mxu0 0.0
        %341 = vmatprep.subr.mxu0 0.0
        %342 = vmatpush1.msra.mxu0 0.0
        %343 = vmatprep.subr.mxu0 0.0
        %344 = vmatpush1.msra.mxu0 0.0
        %345 = vmatprep.subr.mxu0 0.0
        %346 = vmatpush1.msra.mxu0 0.0
        %347 = vmatprep.subr.mxu0 0.0
        %348 = vmatpush1.msra.mxu0 0.0
        %349 = vmatprep.subr.mxu0 0.0
        %350 = vmatpush1.msra.mxu0 0.0
        %351 = vmatprep.subr.mxu0 0.0
        %352 = vmatpush1.msra.mxu0 0.0
        %353 = vmatprep.subr.mxu0 0.0
        %354 = vmatpush1.msra.mxu0 0.0
        %355 = vmatprep.subr.mxu0 0.0
        %356 = vmatpush1.msra.mxu0 0.0
        %357 = vmatprep.subr.mxu0 0.0
        %358 = vmatpush1.msra.mxu0 0.0
        %359 = vmatprep.subr.mxu0 0.0
        %360 = vmatpush1.msra.mxu0 0.0
        %361 = vmatprep.subr.mxu0 0.0
        %362 = vmatpush1.msra.mxu0 0.0
        %363 = vmatprep.subr.mxu0 0.0
        %364 = vmatpush1.msra.mxu0 0.0
        %365 = vmatprep.subr.mxu0 0.0
        %366 = vmatpush1.msra.mxu0 0.0
        %367 = vmatprep.subr.mxu0 0.0
        %368 = vmatpush1.msra.mxu0 0.0
        %369 = vmatprep.subr.mxu0 0.0
        %370 = vmatpush1.msra.mxu0 0.0
        %371 = vmatprep.subr.mxu0 0.0
        %372 = vmatpush1.msra.mxu0 0.0
        %373 = vmatprep.subr.mxu0 0.0
        %374 = vmatpush1.msra.mxu0 0.0
        %375 = vmatprep.subr.mxu0 0.0
        %376 = vmatpush1.msra.mxu0 0.0
        %377 = vmatprep.subr.mxu0 0.0
        %378 = vmatpush1.msra.mxu0 0.0
        %379 = vmatprep.subr.mxu0 0.0
        %380 = vmatpush1.msra.mxu0 0.0
        %381 = vmatprep.subr.mxu0 0.0
        %382 = vmatpush1.msra.mxu0 0.0
        %383 = vmatprep.subr.mxu0 0.0
        %384 = vmatpush1.msra.mxu0 0.0
        %385 = vmatprep.subr.mxu0 0.0
        %386 = vmatpush1.msra.mxu0 0.0
        %387 = vmatprep.subr.mxu0 0.0
        %388 = vmatpush1.msra.mxu0 0.0
        %389 = vmatprep.subr.mxu0 0.0
        %390 = vmatpush1.msra.mxu0 0.0
        %391 = vmatprep.subr.mxu0 0.0
        %392 = vmatpush1.msra.mxu0 0.0
        %393 = vmatprep.subr.mxu0 0.0
        %394 = vmatpush1.msra.mxu0 0.0
        %395 = vmatprep.mubr.f32.mxu0 0.0
        %396 = vmatmul.mubr.f32.gmra.mrb[0].mxu0 %v325
        %v397 = vpop.f32.mrb[0].mxu0
        %v398 = vadd.f32 0.0, %v397
        %v399 = vpop.f32.mrb[0].mxu0
        %400 = vdwg.mxu0
        %v401 = vxor.u32 %v398, 2147483648
        %v402 = vmul.f32 %v401, 1.442695
        %v403 = vpow.pop %v402
        %v404 = vadd.f32 %v403, 1.0
        %v405 = vrcp.pop %v404
        %v406 = vmul.f32 1.0, %v405
        %v407 = vlaneseq
        %v408 = vshrl.u32 %v407, 7
        %v409 = vsub.s32 0, %v408
        %v410 = vrot.slane %v406, %v409
        %412 = vbcast.lane.b32.xlu0 %v410, 256
        %v413 = vpop.permute.xlu0 %412
        %s415 = sor.u32 256, 8
        %416 = vbcast.lane.b32.xlu0 %v410, %s415
        %v417 = vpop.permute.xlu0 %416
        %s419 = sor.u32 256, 16
        %420 = vbcast.lane.b32.xlu0 %v410, %s419
        %v421 = vpop.permute.xlu0 %420
        %s423 = sor.u32 256, 24
        %424 = vbcast.lane.b32.xlu0 %v410, %s423
        %v425 = vpop.permute.xlu0 %424
        %v426 = vmul.f32 %v189, %v413
        %v427 = vmul.f32 %v190, %v413
        %v428 = vmul.f32 %v191, %v417
        %v429 = vmul.f32 %v192, %v417
        %v430 = vmul.f32 %v193, %v421
        %v431 = vmul.f32 %v194, %v421
        %v432 = vmul.f32 %v195, %v425
        %v433 = vmul.f32 %v196, %v425
        %434 = vst [vmem:[%s188] sm:$0xff] %v426
        %435 = vst [vmem:[%s188 + $0x8] sm:$0xff] %v427
        %436 = vst [vmem:[%s188 + $0x10] sm:$0xff] %v428
        %437 = vst [vmem:[%s188 + $0x18] sm:$0xff] %v429
        %438 = vst [vmem:[%s188 + $0x20] sm:$0xff] %v430
        %439 = vst [vmem:[%s188 + $0x28] sm:$0xff] %v431
        %440 = vst [vmem:[%s188 + $0x30] sm:$0xff] %v432
        %441 = vst [vmem:[%s188 + $0x38] sm:$0xff] %v433
        %s442 = sand.u32 %s96, 1
        %s443 = scalar_lea.sflag [#allocation4], %s442
        %s444 = sand.u32 %s96, 1
        %s445 = smul.addr %s444, 64
        %s446 = scalar_lea.vmem [#allocation5], %s445
        // Predicated region
        $region37: #{tpu_custom_call.1} parent=31 // pred_check
          %p447 = pneg %p106
        $region38: #{tpu_custom_call.1} parent=31 // pred_check_branch
          %449 = sbr.rel (%p447) target = $region40
        $region39: #{tpu_custom_call.1} parent=31 // pred_region
          %s451 = ssub.s32 1024, 1024
          %452 = vsyncadd %s443, %s451
          %s453 = smul.addr %s20, 8
          %s454 = smul.addr %s453, 128
          %s455 = scalar_lea.hbm %s3, %s454
          %s456 = sshll.u32 %s446, 4
          %s457 = int_to_ptr.vmem [resolvable:$true] %s456
          %462 = dma.vmem_to_hbm [thread:$0]  %s457, 1024, %s455, %s443, 256, 256, 16
        $region40: #{tpu_custom_call.1} parent=31 // pred_fallthru
          _
      $region32: #{tpu_custom_call.1} parent=5 // pred_fallthru
        _
      %p463 = scmp.le.s32.totalorder 2, %s15
      // Predicated region
      $region41: #{tpu_custom_call.1} parent=5 // pred_check
        %p464 = pneg %p463
      $region42: #{tpu_custom_call.1} parent=5 // pred_check_branch
        %466 = sbr.rel (%p464) target = $region44
      $region43: #{tpu_custom_call.1} parent=5 // pred_region
        %s467 = ssub.s32 %s15, 2
        // Predicated region
        $region45: #{tpu_custom_call.1} parent=43 // pred_check
          %p468 = pneg %p112
        $region46: #{tpu_custom_call.1} parent=43 // pred_check_branch
          %470 = sbr.rel (%p468) target = $region48
        $region47: #{tpu_custom_call.1} parent=43 // pred_region
          %s471 = sand.u32 %s97, 1
          %s472 = scalar_lea.sflag [#allocation4], %s471
          %s473 = sand.u32 %s97, 1
          %s474 = smul.addr %s473, 64
          %s475 = scalar_lea.vmem [#allocation5], %s474
          %476 = dma.done %s472, 1024
        $region48: #{tpu_custom_call.1} parent=43 // pred_fallthru
          _
      $region44: #{tpu_custom_call.1} parent=5 // pred_fallthru
        _
    $region6: #{tpu_custom_call.1} parent=1 // loop_footer
      %s19 = sadd.s32 1, %s15
    $region7: #{tpu_custom_call.1} parent=1 // loop_footer_branch
      %14 = sbr.rel target = $region3
    $region8: #{tpu_custom_call.1} parent=1 // loop_exit
      _
    %477 = vsyncpa [#allocation3], 1
    %s478 = scalar_lea.sflag [#allocation3], 1
    %479 = vsyncpa %s478, 1
    %480 = vsyncpa [#allocation4], 1
    %s481 = scalar_lea.sflag [#allocation4], 1
    %482 = vsyncpa %s481, 1

</llo_original>
